<compile_context>
chip_gen: v7x
topology: tpu7x:2x2x1
jax: 0.10.0
libtpu: 0.0.40
codegen_flags: <defaults>
</compile_context>

<pallas_src>
import functools

import jax
import jax.numpy as jnp
from jax import lax
from jax.experimental import pallas as pl
from jax.experimental.pallas import tpu as pltpu


# ---- feature dims (identical to get_bond_feature_dims()) -------------------
BOND_FEATURE_DIMS = [6, 7, 3]          # bond_type, bond_stereo, is_conjugated
NUM_FEATURES = len(BOND_FEATURE_DIMS)
TOTAL_ROWS = sum(BOND_FEATURE_DIMS)    # 16
ROW_OFFSETS = [0, 6, 13]               # prefix sums of BOND_FEATURE_DIMS
_LANES = 128


def _round_up(x, m):
    return ((x + m - 1) // m) * m


# ---- Pallas kernel ----------------------------------------------------------
def bond_encoder_kernel(attr_ref, table_ref, out_ref, *, edges_per_row):
    """attr_ref:  (rows, P)          int32  packed (i0 | i1<<8 | i2<<16)
       table_ref: (P*16, P*emb_dim)  f32    block-diagonal concat table
       out_ref:   (rows, P*emb_dim)  f32    lane-dense output rows"""
    P = edges_per_row
    rows = attr_ref.shape[0]
    width = P * TOTAL_ROWS

    attr = attr_ref[...]                                      # (rows, P) int32
    col = lax.broadcasted_iota(jnp.int32, (rows, width), 1)   # column ids

    # Multi-hot selection matrix: edge slot s / feature f puts a single 1 at
    # column s*16 + (edge_attr[f] + ROW_OFFSETS[f]).  All targets are
    # disjoint, so OR == sum; built directly from the compares (no zeros+add).
    hit = None
    for s in range(P):                                        # static unroll
        g = attr[:, s:s + 1]                                  # (rows, 1)
        base = s * TOTAL_ROWS
        for f in range(NUM_FEATURES):                         # static unroll
            idx = ((g >> (8 * f)) & 0xFF) + base              # (rows, 1)
            h = col == idx
            hit = h if hit is None else (hit | h)
    multi_hot = hit.astype(jnp.float32)

    # Sum-of-embedding-lookups == multi_hot @ block-diagonal table (MXU).
    out_ref[...] = jnp.dot(multi_hot, table_ref[...],
                           preferred_element_type=jnp.float32)


# ---- wrapper ----------------------------------------------------------------
def bond_encoder(edge_attr, tables, *, tile_e=256):
    """edge_attr: (E, 3) int32; tables: list of 3 (dim_f, emb_dim) f32 arrays.
    Returns (E, emb_dim) f32 == sum_f tables[f][edge_attr[:, f]]."""
    E, F = edge_attr.shape
    assert F == NUM_FEATURES
    emb_dim = tables[0].shape[1]

    # Lane packing factor: P edges per (lane-dense) output row.
    if emb_dim % _LANES == 0:
        P = 1                                    # output already lane-dense
    elif _LANES % emb_dim == 0:
        P = _LANES // emb_dim                    # pack P edges per 128 lanes
    else:
        P = 1  # TODO(synk): emb_dim that doesn't divide/multiple-of 128 falls back to masked stores
    if tile_e % (8 * P) != 0:
        tile_e = _round_up(tile_e, 8 * P)

    # Keep >= 2 grid steps when the problem allows it (v7x megacore), but
    # never shrink a tile below 8*P edges.
    tile_e = max(8 * P, min(tile_e, _round_up(pl.cdiv(E, 2), 8 * P)))

    E_pad = _round_up(E, tile_e)
    grid = E_pad // tile_e
    rows_per_tile = tile_e // P

    # --- tiny host/XLA-side parameter & index preprocessing ------------------
    # Concat table (16, emb_dim) -> block-diagonal (P*16, P*emb_dim).
    concat = jnp.concatenate(tables, axis=0).astype(jnp.float32)
    big_table = jnp.zeros((P * TOTAL_ROWS, P * emb_dim), jnp.float32)
    for s in range(P):
        big_table = big_table.at[s * TOTAL_ROWS:(s + 1) * TOTAL_ROWS,
                                 s * emb_dim:(s + 1) * emb_dim].set(concat)

    # Pack the 3 feature indices (table offsets baked in) into one int32/edge.
    g = edge_attr.astype(jnp.int32) + jnp.asarray(ROW_OFFSETS, jnp.int32)
    packed = g[:, 0] | (g[:, 1] << 8) | (g[:, 2] << 16)            # (E,)
    packed = jnp.pad(packed, (0, E_pad - E)).reshape(E_pad // P, P)

    kernel = functools.partial(bond_encoder_kernel, edges_per_row=P)

    # Constant table: its index_map never changes -> single-buffer it.
    table_block = (P * TOTAL_ROWS, P * emb_dim)
    try:
        table_spec = pl.BlockSpec(table_block, lambda i: (0, 0),
                                  pipeline_mode=pl.Buffered(1))
    except TypeError:  # older jax without the pipeline_mode kwarg
        table_spec = pl.BlockSpec(table_block, lambda i: (0, 0))

    cost = pl.CostEstimate(
        flops=2 * E_pad * TOTAL_ROWS * emb_dim,
        transcendentals=0,
        bytes_accessed=(E_pad * 4                       # packed indices in
                        + E_pad * emb_dim * 4           # embeddings out
                        + P * TOTAL_ROWS * P * emb_dim * 4))  # table in

    out_flat = pl.pallas_call(
        kernel,
        out_shape=jax.ShapeDtypeStruct((E_pad // P, P * emb_dim), jnp.float32),
        grid_spec=pltpu.PrefetchScalarGridSpec(
            num_scalar_prefetch=0,
            grid=(grid,),
            in_specs=[
                pl.BlockSpec((rows_per_tile, P), lambda i: (i, 0)),   # edges
                table_spec,                                           # table
            ],
            out_specs=pl.BlockSpec((rows_per_tile, P * emb_dim),
                                   lambda i: (i, 0)),
        ),
        compiler_params=pltpu.CompilerParams(
            dimension_semantics=("parallel",),
            vmem_limit_bytes=32 * 1024 * 1024),
        cost_estimate=cost,
    )(packed, big_table)

    out = out_flat.reshape(E_pad, emb_dim)   # free row-major view
    return out if E == E_pad else out[:E]


# ---- deterministic parameter init (xavier_uniform_, as in __init__) --------
def init_bond_embeddings(key, emb_dim):
    tables = []
    for i, dim in enumerate(BOND_FEATURE_DIMS):
        k = jax.random.fold_in(key, i)
        bound = (6.0 / (dim + emb_dim)) ** 0.5            # xavier uniform bound
        tables.append(jax.random.uniform(k, (dim, emb_dim), jnp.float32,
                                         minval=-bound, maxval=bound))
    return tables


# ---- pure-JAX reference for correctness -------------------------------------
def bond_encoder_ref(edge_attr, tables):
    out = 0
    for f in range(NUM_FEATURES):
        out = out + jnp.take(tables[f], edge_attr[:, f], axis=0)
    return out


if __name__ == "__main__":
    key = jax.random.PRNGKey(0)
    emb_dim = 32
    E = 1000            # number of edges (non-multiple of the tile on purpose)

    tables = init_bond_embeddings(key, emb_dim)

    # edge_attr[:, f] in [0, BOND_FEATURE_DIMS[f])
    ka, kb, kc = jax.random.split(jax.random.fold_in(key, 99), 3)
    edge_attr = jnp.stack([
        jax.random.randint(ka, (E,), 0, BOND_FEATURE_DIMS[0]),
        jax.random.randint(kb, (E,), 0, BOND_FEATURE_DIMS[1]),
        jax.random.randint(kc, (E,), 0, BOND_FEATURE_DIMS[2]),
    ], axis=1).astype(jnp.int32)                          # (E, 3)

    out = jax.block_until_ready(bond_encoder(edge_attr, tables))
    ref = bond_encoder_ref(edge_attr, tables)

    assert out.shape == (E, emb_dim)
    assert jnp.allclose(out, ref, atol=1e-4, rtol=1e-4), \
        float(jnp.max(jnp.abs(out - ref)))

    print("KERNEL_OK")
</pallas_src>

<mosaic_0001>
module attributes {stable_mosaic.version = 11 : i64} {
  func.func @bond_encoder_kernel(%arg0: i32, %arg1: memref<64x4xi32, #tpu.memory_space<vmem>>, %arg2: memref<64x128xf32, #tpu.memory_space<vmem>>, %arg3: memref<64x128xf32, #tpu.memory_space<vmem>>) attributes {dimension_semantics = [#tpu.dimension_semantics<parallel>], iteration_bounds = array<i64: 4>, scalar_prefetch = 0 : i64, scratch_operands = 0 : i64, tpu.core_type = #tpu.core_type<tc>, window_params = [{transform_indices = @transform_0, window_bounds = array<i64: 64, 4>}, {pipeline_mode = #tpu.pipeline_mode<synchronous>, transform_indices = @transform_1, window_bounds = array<i64: 64, 128>}, {transform_indices = @transform_2, window_bounds = array<i64: 64, 128>}]} {
    %c0 = arith.constant 0 : index
    %c0_0 = arith.constant 0 : index
    %0 = vector.load %arg1[%c0, %c0_0] : memref<64x4xi32, #tpu.memory_space<vmem>>, vector<64x4xi32>
    %1 = tpu.iota {dimensions = array<i32: 1>} : vector<64x64xi32>
    %2 = vector.extract_strided_slice %0 {offsets = [0, 0], sizes = [64, 1], strides = [1, 1]} : vector<64x4xi32> to vector<64x1xi32>
    %c0_i32 = arith.constant 0 : i32
    %3 = vector.broadcast %c0_i32 : i32 to vector<64x1xi32>
    %4 = arith.shrsi %2, %3 : vector<64x1xi32>
    %c255_i32 = arith.constant 255 : i32
    %5 = vector.broadcast %c255_i32 : i32 to vector<64x1xi32>
    %6 = arith.andi %4, %5 : vector<64x1xi32>
    %c0_i32_1 = arith.constant 0 : i32
    %7 = vector.broadcast %c0_i32_1 : i32 to vector<64x1xi32>
    %8 = arith.addi %6, %7 : vector<64x1xi32>
    %9 = vector.broadcast %8 : vector<64x1xi32> to vector<64x64xi32>
    %10 = arith.cmpi eq, %1, %9 : vector<64x64xi32>
    %c8_i32 = arith.constant 8 : i32
    %11 = vector.broadcast %c8_i32 : i32 to vector<64x1xi32>
    %12 = arith.shrsi %2, %11 : vector<64x1xi32>
    %c255_i32_2 = arith.constant 255 : i32
    %13 = vector.broadcast %c255_i32_2 : i32 to vector<64x1xi32>
    %14 = arith.andi %12, %13 : vector<64x1xi32>
    %c0_i32_3 = arith.constant 0 : i32
    %15 = vector.broadcast %c0_i32_3 : i32 to vector<64x1xi32>
    %16 = arith.addi %14, %15 : vector<64x1xi32>
    %17 = vector.broadcast %16 : vector<64x1xi32> to vector<64x64xi32>
    %18 = arith.cmpi eq, %1, %17 : vector<64x64xi32>
    %19 = arith.ori %10, %18 : vector<64x64xi1>
    %c16_i32 = arith.constant 16 : i32
    %20 = vector.broadcast %c16_i32 : i32 to vector<64x1xi32>
    %21 = arith.shrsi %2, %20 : vector<64x1xi32>
    %c255_i32_4 = arith.constant 255 : i32
    %22 = vector.broadcast %c255_i32_4 : i32 to vector<64x1xi32>
    %23 = arith.andi %21, %22 : vector<64x1xi32>
    %c0_i32_5 = arith.constant 0 : i32
    %24 = vector.broadcast %c0_i32_5 : i32 to vector<64x1xi32>
    %25 = arith.addi %23, %24 : vector<64x1xi32>
    %26 = vector.broadcast %25 : vector<64x1xi32> to vector<64x64xi32>
    %27 = arith.cmpi eq, %1, %26 : vector<64x64xi32>
    %28 = arith.ori %19, %27 : vector<64x64xi1>
    %29 = vector.extract_strided_slice %0 {offsets = [0, 1], sizes = [64, 1], strides = [1, 1]} : vector<64x4xi32> to vector<64x1xi32>
    %c0_i32_6 = arith.constant 0 : i32
    %30 = vector.broadcast %c0_i32_6 : i32 to vector<64x1xi32>
    %31 = arith.shrsi %29, %30 : vector<64x1xi32>
    %c255_i32_7 = arith.constant 255 : i32
    %32 = vector.broadcast %c255_i32_7 : i32 to vector<64x1xi32>
    %33 = arith.andi %31, %32 : vector<64x1xi32>
    %c16_i32_8 = arith.constant 16 : i32
    %34 = vector.broadcast %c16_i32_8 : i32 to vector<64x1xi32>
    %35 = arith.addi %33, %34 : vector<64x1xi32>
    %36 = vector.broadcast %35 : vector<64x1xi32> to vector<64x64xi32>
    %37 = arith.cmpi eq, %1, %36 : vector<64x64xi32>
    %38 = arith.ori %28, %37 : vector<64x64xi1>
    %c8_i32_9 = arith.constant 8 : i32
    %39 = vector.broadcast %c8_i32_9 : i32 to vector<64x1xi32>
    %40 = arith.shrsi %29, %39 : vector<64x1xi32>
    %c255_i32_10 = arith.constant 255 : i32
    %41 = vector.broadcast %c255_i32_10 : i32 to vector<64x1xi32>
    %42 = arith.andi %40, %41 : vector<64x1xi32>
    %c16_i32_11 = arith.constant 16 : i32
    %43 = vector.broadcast %c16_i32_11 : i32 to vector<64x1xi32>
    %44 = arith.addi %42, %43 : vector<64x1xi32>
    %45 = vector.broadcast %44 : vector<64x1xi32> to vector<64x64xi32>
    %46 = arith.cmpi eq, %1, %45 : vector<64x64xi32>
    %47 = arith.ori %38, %46 : vector<64x64xi1>
    %c16_i32_12 = arith.constant 16 : i32
    %48 = vector.broadcast %c16_i32_12 : i32 to vector<64x1xi32>
    %49 = arith.shrsi %29, %48 : vector<64x1xi32>
    %c255_i32_13 = arith.constant 255 : i32
    %50 = vector.broadcast %c255_i32_13 : i32 to vector<64x1xi32>
    %51 = arith.andi %49, %50 : vector<64x1xi32>
    %c16_i32_14 = arith.constant 16 : i32
    %52 = vector.broadcast %c16_i32_14 : i32 to vector<64x1xi32>
    %53 = arith.addi %51, %52 : vector<64x1xi32>
    %54 = vector.broadcast %53 : vector<64x1xi32> to vector<64x64xi32>
    %55 = arith.cmpi eq, %1, %54 : vector<64x64xi32>
    %56 = arith.ori %47, %55 : vector<64x64xi1>
    %57 = vector.extract_strided_slice %0 {offsets = [0, 2], sizes = [64, 1], strides = [1, 1]} : vector<64x4xi32> to vector<64x1xi32>
    %c0_i32_15 = arith.constant 0 : i32
    %58 = vector.broadcast %c0_i32_15 : i32 to vector<64x1xi32>
    %59 = arith.shrsi %57, %58 : vector<64x1xi32>
    %c255_i32_16 = arith.constant 255 : i32
    %60 = vector.broadcast %c255_i32_16 : i32 to vector<64x1xi32>
    %61 = arith.andi %59, %60 : vector<64x1xi32>
    %c32_i32 = arith.constant 32 : i32
    %62 = vector.broadcast %c32_i32 : i32 to vector<64x1xi32>
    %63 = arith.addi %61, %62 : vector<64x1xi32>
    %64 = vector.broadcast %63 : vector<64x1xi32> to vector<64x64xi32>
    %65 = arith.cmpi eq, %1, %64 : vector<64x64xi32>
    %66 = arith.ori %56, %65 : vector<64x64xi1>
    %c8_i32_17 = arith.constant 8 : i32
    %67 = vector.broadcast %c8_i32_17 : i32 to vector<64x1xi32>
    %68 = arith.shrsi %57, %67 : vector<64x1xi32>
    %c255_i32_18 = arith.constant 255 : i32
    %69 = vector.broadcast %c255_i32_18 : i32 to vector<64x1xi32>
    %70 = arith.andi %68, %69 : vector<64x1xi32>
    %c32_i32_19 = arith.constant 32 : i32
    %71 = vector.broadcast %c32_i32_19 : i32 to vector<64x1xi32>
    %72 = arith.addi %70, %71 : vector<64x1xi32>
    %73 = vector.broadcast %72 : vector<64x1xi32> to vector<64x64xi32>
    %74 = arith.cmpi eq, %1, %73 : vector<64x64xi32>
    %75 = arith.ori %66, %74 : vector<64x64xi1>
    %c16_i32_20 = arith.constant 16 : i32
    %76 = vector.broadcast %c16_i32_20 : i32 to vector<64x1xi32>
    %77 = arith.shrsi %57, %76 : vector<64x1xi32>
    %c255_i32_21 = arith.constant 255 : i32
    %78 = vector.broadcast %c255_i32_21 : i32 to vector<64x1xi32>
    %79 = arith.andi %77, %78 : vector<64x1xi32>
    %c32_i32_22 = arith.constant 32 : i32
    %80 = vector.broadcast %c32_i32_22 : i32 to vector<64x1xi32>
    %81 = arith.addi %79, %80 : vector<64x1xi32>
    %82 = vector.broadcast %81 : vector<64x1xi32> to vector<64x64xi32>
    %83 = arith.cmpi eq, %1, %82 : vector<64x64xi32>
    %84 = arith.ori %75, %83 : vector<64x64xi1>
    %85 = vector.extract_strided_slice %0 {offsets = [0, 3], sizes = [64, 1], strides = [1, 1]} : vector<64x4xi32> to vector<64x1xi32>
    %c0_i32_23 = arith.constant 0 : i32
    %86 = vector.broadcast %c0_i32_23 : i32 to vector<64x1xi32>
    %87 = arith.shrsi %85, %86 : vector<64x1xi32>
    %c255_i32_24 = arith.constant 255 : i32
    %88 = vector.broadcast %c255_i32_24 : i32 to vector<64x1xi32>
    %89 = arith.andi %87, %88 : vector<64x1xi32>
    %c48_i32 = arith.constant 48 : i32
    %90 = vector.broadcast %c48_i32 : i32 to vector<64x1xi32>
    %91 = arith.addi %89, %90 : vector<64x1xi32>
    %92 = vector.broadcast %91 : vector<64x1xi32> to vector<64x64xi32>
    %93 = arith.cmpi eq, %1, %92 : vector<64x64xi32>
    %94 = arith.ori %84, %93 : vector<64x64xi1>
    %c8_i32_25 = arith.constant 8 : i32
    %95 = vector.broadcast %c8_i32_25 : i32 to vector<64x1xi32>
    %96 = arith.shrsi %85, %95 : vector<64x1xi32>
    %c255_i32_26 = arith.constant 255 : i32
    %97 = vector.broadcast %c255_i32_26 : i32 to vector<64x1xi32>
    %98 = arith.andi %96, %97 : vector<64x1xi32>
    %c48_i32_27 = arith.constant 48 : i32
    %99 = vector.broadcast %c48_i32_27 : i32 to vector<64x1xi32>
    %100 = arith.addi %98, %99 : vector<64x1xi32>
    %101 = vector.broadcast %100 : vector<64x1xi32> to vector<64x64xi32>
    %102 = arith.cmpi eq, %1, %101 : vector<64x64xi32>
    %103 = arith.ori %94, %102 : vector<64x64xi1>
    %c16_i32_28 = arith.constant 16 : i32
    %104 = vector.broadcast %c16_i32_28 : i32 to vector<64x1xi32>
    %105 = arith.shrsi %85, %104 : vector<64x1xi32>
    %c255_i32_29 = arith.constant 255 : i32
    %106 = vector.broadcast %c255_i32_29 : i32 to vector<64x1xi32>
    %107 = arith.andi %105, %106 : vector<64x1xi32>
    %c48_i32_30 = arith.constant 48 : i32
    %108 = vector.broadcast %c48_i32_30 : i32 to vector<64x1xi32>
    %109 = arith.addi %107, %108 : vector<64x1xi32>
    %110 = vector.broadcast %109 : vector<64x1xi32> to vector<64x64xi32>
    %111 = arith.cmpi eq, %1, %110 : vector<64x64xi32>
    %112 = arith.ori %103, %111 : vector<64x64xi1>
    %113 = arith.extui %112 : vector<64x64xi1> to vector<64x64xi32>
    %114 = arith.sitofp %113 : vector<64x64xi32> to vector<64x64xf32>
    %c0_31 = arith.constant 0 : index
    %c0_32 = arith.constant 0 : index
    %115 = vector.load %arg2[%c0_31, %c0_32] : memref<64x128xf32, #tpu.memory_space<vmem>>, vector<64x128xf32>
    %cst = arith.constant dense<0.000000e+00> : vector<64x128xf32>
    %116 = tpu.matmul %114, %115, %cst {dimension_numbers = #tpu.dot_dimension_numbers<[1], [0], [0], [1], [0, 0, 1, 1], [], []>} : vector<64x64xf32>, vector<64x128xf32>, vector<64x128xf32> -> vector<64x128xf32>
    %c0_33 = arith.constant 0 : index
    %c0_34 = arith.constant 0 : index
    %117 = vector.load %arg3[%c0_33, %c0_34] : memref<64x128xf32, #tpu.memory_space<vmem>>, vector<64x128xf32>
    tpu.vector_store %arg3[%c0_33, %c0_34], %116 {strides = array<i32>} : memref<64x128xf32, #tpu.memory_space<vmem>>, vector<64x128xf32>,
    return
  }
  func.func @transform_0(%arg0: i32) -> (i32, i32) {
    %c0_i32 = arith.constant 0 : i32
    %c0_i32_0 = arith.constant 0 : i32
    return %arg0, %c0_i32 : i32, i32
  }
  func.func @transform_1(%arg0: i32) -> (i32, i32) {
    %c0_i32 = arith.constant 0 : i32
    %c0_i32_0 = arith.constant 0 : i32
    %c0_i32_1 = arith.constant 0 : i32
    return %c0_i32, %c0_i32_0 : i32, i32
  }
  func.func @transform_2(%arg0: i32) -> (i32, i32) {
    %c0_i32 = arith.constant 0 : i32
    %c0_i32_0 = arith.constant 0 : i32
    return %arg0, %c0_i32 : i32, i32
  }
}

</mosaic_0001>

<llo_original>
// kernel: tpu_custom_call.1
$region0: #{tpu_custom_call.1}
  #allocation0 [shape = 'u32[]', space=smem, size = 0x4, offset = 0x4, fixed_abs, tag = 'smem constant byte address 0x4 - core index']
  #allocation1 [shape = 'u32[144,128]{1,0:T(1,128)}', space=vmem, size = 0x12000, scoped, tag = 'internal scratch']
  %s0 = inlined_call_operand.vmem [shape: s32[256,4], index: 0, kind: input, shape index: {}]
  %s1 = inlined_call_operand.vmem [shape: f32[64,128], index: 1, kind: input, shape index: {}]
  %s2 = inlined_call_operand.hbm [shape: f32[256,128], index: 2, kind: output, shape index: {}]
  %s3 = sld [smem:[#allocation0]]
  $region41: #{tpu_custom_call.1} parent=0
    _
  %s5 = ssub.s32 1, %s3
  %s6 = scalar_select 0, %s5, %s3
  $region1: #{tpu_custom_call.1} parent=0
    #allocation2 [shape = 'u8[65536]{0}', space=vmem, size = 0x10000, scoped, tag = 'output window, operand 0']
    #allocation3 [shape = 's32[2]{0}', space=sflag, size = 0x8, scoped, tag = 'scoped memory for tpu_custom_call.1']
    %7 = vsyncpa [#allocation3], 0
    %s8 = scalar_lea.sflag [#allocation3], 1
    %9 = vsyncpa %s8, 0
    loop: start=0, step=1, limit=6
    $region2: #{tpu_custom_call.1} parent=1 // loop_pre_header
      _
    $region3: #{tpu_custom_call.1} parent=1 // loop_header
      %s11 = sphi 0, %s15
      %p12 = scmp.ge.s32.totalorder %s11, 6
      %s21 = sphi 0, %s23
      %s24 = sphi 0, %s21
      %s25 = sphi 0, %s24
      %s41 = sphi 0, %s25
      %s45 = sphi 0, %s45
      %s47 = sphi 0, %s45
      %s48 = sphi 0, %s47
      %s62 = sphi 0, %s48
      %s68 = sphi 0, %s70
      %s71 = sphi 0, %s68
      %s72 = sphi 0, %s71
      %s88 = sphi 0, %s72
    $region4: #{tpu_custom_call.1} parent=1 // loop_header_branch
      %14 = sbr.rel (%p12) target = $region8
    $region5: #{tpu_custom_call.1} parent=1 // loop_body
      %s16 = ssub.s32 %s11, 1
      %s17 = ssub.s32 %s11, 2
      %s18 = sadd.s32 %s11, 1
      %s19 = ssub.s32 %s11, %s18
      %p20 = scmp.eq.s32.totalorder %s19, 0
      %s22 = sadd.s32 %s21, 1
      %s23 = scalar_select %p20, %s21, %s22
      %p26 = pneg %p20
      %p27 = scmp.eq.s32.totalorder %s11, 3
      %p28 = por %p26, %p27
      %p29 = scmp.ne.s32.totalorder %s21, %s24
      %p30 = scmp.eq.s32.totalorder %s11, 0
      %p31 = por %p29, %p30
      %p32 = scmp.ne.s32.totalorder %s21, %s24
      %p33 = scmp.eq.s32.totalorder %s16, 3
      %p34 = por %p32, %p33
      %p35 = scmp.ne.s32.totalorder %s24, %s25
      %p36 = scmp.eq.s32.totalorder %s16, 0
      %p37 = por %p35, %p36
      %p38 = scmp.ne.s32.totalorder %s24, %s25
      %p39 = scmp.eq.s32.totalorder %s17, 3
      %p40 = por %p38, %p39
      %p42 = scmp.ne.s32.totalorder %s25, %s41
      %p43 = scmp.eq.s32.totalorder %s17, 0
      %p44 = por %p42, %p43
      %s46 = sadd.s32 %s45, 1
      %p49 = scmp.eq.s32.totalorder %s11, 3
      %p50 = scmp.ne.s32.totalorder %s45, %s47
      %p51 = scmp.eq.s32.totalorder %s11, 0
      %p52 = por %p50, %p51
      %p53 = scmp.ne.s32.totalorder %s45, %s47
      %p54 = scmp.eq.s32.totalorder %s16, 3
      %p55 = por %p53, %p54
      %p56 = scmp.ne.s32.totalorder %s47, %s48
      %p57 = scmp.eq.s32.totalorder %s16, 0
      %p58 = por %p56, %p57
      %p59 = scmp.ne.s32.totalorder %s47, %s48
      %p60 = scmp.eq.s32.totalorder %s17, 3
      %p61 = por %p59, %p60
      %p63 = scmp.ne.s32.totalorder %s48, %s62
      %p64 = scmp.eq.s32.totalorder %s17, 0
      %p65 = por %p63, %p64
      %s66 = ssub.s32 %s11, %s18
      %p67 = scmp.eq.s32.totalorder %s66, 0
      %s69 = sadd.s32 %s68, 1
      %s70 = scalar_select %p67, %s68, %s69
      %p73 = pneg %p67
      %p74 = scmp.eq.s32.totalorder %s11, 3
      %p75 = por %p73, %p74
      %p76 = scmp.ne.s32.totalorder %s68, %s71
      %p77 = scmp.eq.s32.totalorder %s11, 0
      %p78 = por %p76, %p77
      %p79 = scmp.ne.s32.totalorder %s68, %s71
      %p80 = scmp.eq.s32.totalorder %s16, 3
      %p81 = por %p79, %p80
      %p82 = scmp.ne.s32.totalorder %s71, %s72
      %p83 = scmp.eq.s32.totalorder %s16, 0
      %p84 = por %p82, %p83
      %p85 = scmp.ne.s32.totalorder %s71, %s72
      %p86 = scmp.eq.s32.totalorder %s17, 3
      %p87 = por %p85, %p86
      %p89 = scmp.ne.s32.totalorder %s72, %s88
      %p90 = scmp.eq.s32.totalorder %s17, 0
      %p91 = por %p89, %p90
      %p92 = scmp.le.s32.totalorder 1, %s11
      %p93 = scmp.lt.s32.totalorder %s11, 5
      %p94 = pnand %p92, %p93
      %p95 = pneg %p94
      // Predicated region
      $region9: #{tpu_custom_call.1} parent=5 // pred_check
        _
      $region10: #{tpu_custom_call.1} parent=5 // pred_check_branch
        %97 = sbr.rel (%p94) target = $region12
      $region11: #{tpu_custom_call.1} parent=5 // pred_region
        %s98 = ssub.s32 %s11, 1
        // Predicated region
        $region13: #{tpu_custom_call.1} parent=11 // pred_check
          %p99 = pneg %p58
        $region14: #{tpu_custom_call.1} parent=11 // pred_check_branch
          %101 = sbr.rel (%p99) target = $region16
        $region15: #{tpu_custom_call.1} parent=11 // pred_region
          _
        $region16: #{tpu_custom_call.1} parent=11 // pred_fallthru
          _
      $region12: #{tpu_custom_call.1} parent=5 // pred_fallthru
        _
      %p102 = scmp.lt.s32.totalorder %s11, 4
      // Predicated region
      $region17: #{tpu_custom_call.1} parent=5 // pred_check
        %p103 = pneg %p102
      $region18: #{tpu_custom_call.1} parent=5 // pred_check_branch
        %105 = sbr.rel (%p103) target = $region20
      $region19: #{tpu_custom_call.1} parent=5 // pred_region
        // Predicated region
        $region21: #{tpu_custom_call.1} parent=19 // pred_check
          %p106 = pneg %p31
        $region22: #{tpu_custom_call.1} parent=19 // pred_check_branch
          %108 = sbr.rel (%p106) target = $region24
        $region23: #{tpu_custom_call.1} parent=19 // pred_region
          %s109 = smul.u32 8, %s11
          %p110 = scmp.lt.s32.totalorder %s109, 31
          %s111 = scalar_select %p110, %s109, 31
          %s112 = smul.addr %s111, 8
          %s113 = scalar_lea.vmem %s0, %s112
          %s114 = smul.u32 8, %s11
        $region24: #{tpu_custom_call.1} parent=19 // pred_fallthru
          _
      $region20: #{tpu_custom_call.1} parent=5 // pred_fallthru
        _
      %p115 = scmp.le.s32.totalorder 1, %s11
      %p116 = scmp.lt.s32.totalorder %s11, 5
      %p117 = pnand %p115, %p116
      %p118 = pneg %p117
      // Predicated region
      $region25: #{tpu_custom_call.1} parent=5 // pred_check
        _
      $region26: #{tpu_custom_call.1} parent=5 // pred_check_branch
        %120 = sbr.rel (%p117) target = $region28
      $region27: #{tpu_custom_call.1} parent=5 // pred_region
        %s121 = ssub.s32 %s11, 1
        %s122 = smul.u32 8, %s16
        %p123 = scmp.lt.s32.totalorder %s122, 31
        %s124 = scalar_select %p123, %s122, 31
        %s125 = smul.addr %s124, 8
        %s126 = scalar_lea.vmem %s0, %s125
        %p127 = pneg %p37
        %p128 = pneg %p34
        %p129 = pneg %p58
        %p130 = pneg %p55
        %p131 = pneg %p84
        %p132 = pneg %p81
        %s133 = sand.u32 %s71, 1
        %s134 = scalar_lea.sflag [#allocation3], %s133
        %s135 = sand.u32 %s71, 1
        %s136 = smul.addr %s135, 64
        %s137 = scalar_lea.vmem [#allocation2], %s136
        %s138 = smul.u32 8, %s16
        %p139 = scmp.lt.s32.totalorder %s138, 31
        %s140 = scalar_select %p139, %s138, 31
        %s141 = smul.addr %s140, 8
        %s142 = scalar_lea.vmem %s0, %s141
        %s143 = smul.u32 8, %s16
        %s144 = smul.u32 8, %s16
        %v145 = vld [vmem:[%s142] sm:$0xff]
        %v146 = vld [vmem:[%s142 + $0x8] sm:$0xff]
        %v147 = vld [vmem:[%s142 + $0x10] sm:$0xff]
        %v148 = vld [vmem:[%s142 + $0x18] sm:$0xff]
        %v149 = vld [vmem:[%s142 + $0x20] sm:$0xff]
        %v150 = vld [vmem:[%s142 + $0x28] sm:$0xff]
        %v151 = vld [vmem:[%s142 + $0x30] sm:$0xff]
        %v152 = vld [vmem:[%s142 + $0x38] sm:$0xff]
        %v153 = vlaneseq
        %v154 = vand.u32 %v153, 127
        %v155 = vand.u32 %v145, 255
        %v156 = vand.u32 %v146, 255
        %v157 = vand.u32 %v147, 255
        %v158 = vand.u32 %v148, 255
        %v159 = vand.u32 %v149, 255
        %v160 = vand.u32 %v150, 255
        %v161 = vand.u32 %v151, 255
        %v162 = vand.u32 %v152, 255
        %163 = vset.pattern.permute.xlu0 0
        %164 = vperm.xlu0 %163, %v155
        %v165 = vpop.permute.xlu0 %164
        %166 = vset.pattern.permute.xlu0 0
        %167 = vperm.xlu0 %166, %v156
        %v168 = vpop.permute.xlu0 %167
        %169 = vset.pattern.permute.xlu0 0
        %170 = vperm.xlu0 %169, %v157
        %v171 = vpop.permute.xlu0 %170
        %172 = vset.pattern.permute.xlu0 0
        %173 = vperm.xlu0 %172, %v158
        %v174 = vpop.permute.xlu0 %173
        %175 = vset.pattern.permute.xlu0 0
        %176 = vperm.xlu0 %175, %v159
        %v177 = vpop.permute.xlu0 %176
        %178 = vset.pattern.permute.xlu0 0
        %179 = vperm.xlu0 %178, %v160
        %v180 = vpop.permute.xlu0 %179
        %181 = vset.pattern.permute.xlu0 0
        %182 = vperm.xlu0 %181, %v161
        %v183 = vpop.permute.xlu0 %182
        %184 = vset.pattern.permute.xlu0 0
        %185 = vperm.xlu0 %184, %v162
        %v186 = vpop.permute.xlu0 %185
        %vm187 = vcmp.eq.s32.totalorder %v154, %v165
        %vm188 = vcmp.eq.s32.totalorder %v154, %v168
        %vm189 = vcmp.eq.s32.totalorder %v154, %v171
        %vm190 = vcmp.eq.s32.totalorder %v154, %v174
        %vm191 = vcmp.eq.s32.totalorder %v154, %v177
        %vm192 = vcmp.eq.s32.totalorder %v154, %v180
        %vm193 = vcmp.eq.s32.totalorder %v154, %v183
        %vm194 = vcmp.eq.s32.totalorder %v154, %v186
        %v195 = vshra.s32 %v145, 8
        %v196 = vshra.s32 %v146, 8
        %v197 = vshra.s32 %v147, 8
        %v198 = vshra.s32 %v148, 8
        %v199 = vshra.s32 %v149, 8
        %v200 = vshra.s32 %v150, 8
        %v201 = vshra.s32 %v151, 8
        %v202 = vshra.s32 %v152, 8
        %v203 = vand.u32 %v195, 255
        %v204 = vand.u32 %v196, 255
        %v205 = vand.u32 %v197, 255
        %v206 = vand.u32 %v198, 255
        %v207 = vand.u32 %v199, 255
        %v208 = vand.u32 %v200, 255
        %v209 = vand.u32 %v201, 255
        %v210 = vand.u32 %v202, 255
        %211 = vset.pattern.permute.xlu0 0
        %212 = vperm.xlu0 %211, %v203
        %v213 = vpop.permute.xlu0 %212
        %214 = vset.pattern.permute.xlu0 0
        %215 = vperm.xlu0 %214, %v204
        %v216 = vpop.permute.xlu0 %215
        %217 = vset.pattern.permute.xlu0 0
        %218 = vperm.xlu0 %217, %v205
        %v219 = vpop.permute.xlu0 %218
        %220 = vset.pattern.permute.xlu0 0
        %221 = vperm.xlu0 %220, %v206
        %v222 = vpop.permute.xlu0 %221
        %223 = vset.pattern.permute.xlu0 0
        %224 = vperm.xlu0 %223, %v207
        %v225 = vpop.permute.xlu0 %224
        %226 = vset.pattern.permute.xlu0 0
        %227 = vperm.xlu0 %226, %v208
        %v228 = vpop.permute.xlu0 %227
        %229 = vset.pattern.permute.xlu0 0
        %230 = vperm.xlu0 %229, %v209
        %v231 = vpop.permute.xlu0 %230
        %232 = vset.pattern.permute.xlu0 0
        %233 = vperm.xlu0 %232, %v210
        %v234 = vpop.permute.xlu0 %233
        %vm235 = vcmp.eq.s32.totalorder %v154, %v213
        %vm236 = vcmp.eq.s32.totalorder %v154, %v216
        %vm237 = vcmp.eq.s32.totalorder %v154, %v219
        %vm238 = vcmp.eq.s32.totalorder %v154, %v222
        %vm239 = vcmp.eq.s32.totalorder %v154, %v225
        %vm240 = vcmp.eq.s32.totalorder %v154, %v228
        %vm241 = vcmp.eq.s32.totalorder %v154, %v231
        %vm242 = vcmp.eq.s32.totalorder %v154, %v234
        %vm243 = vmor %vm187, %vm235
        %vm244 = vmor %vm188, %vm236
        %vm245 = vmor %vm189, %vm237
        %vm246 = vmor %vm190, %vm238
        %vm247 = vmor %vm191, %vm239
        %vm248 = vmor %vm192, %vm240
        %vm249 = vmor %vm193, %vm241
        %vm250 = vmor %vm194, %vm242
        %v251 = vshra.s32 %v145, 16
        %v252 = vshra.s32 %v146, 16
        %v253 = vshra.s32 %v147, 16
        %v254 = vshra.s32 %v148, 16
        %v255 = vshra.s32 %v149, 16
        %v256 = vshra.s32 %v150, 16
        %v257 = vshra.s32 %v151, 16
        %v258 = vshra.s32 %v152, 16
        %v259 = vand.u32 %v251, 255
        %v260 = vand.u32 %v252, 255
        %v261 = vand.u32 %v253, 255
        %v262 = vand.u32 %v254, 255
        %v263 = vand.u32 %v255, 255
        %v264 = vand.u32 %v256, 255
        %v265 = vand.u32 %v257, 255
        %v266 = vand.u32 %v258, 255
        %267 = vset.pattern.permute.xlu0 0
        %268 = vperm.xlu0 %267, %v259
        %v269 = vpop.permute.xlu0 %268
        %270 = vset.pattern.permute.xlu0 0
        %271 = vperm.xlu0 %270, %v260
        %v272 = vpop.permute.xlu0 %271
        %273 = vset.pattern.permute.xlu0 0
        %274 = vperm.xlu0 %273, %v261
        %v275 = vpop.permute.xlu0 %274
        %276 = vset.pattern.permute.xlu0 0
        %277 = vperm.xlu0 %276, %v262
        %v278 = vpop.permute.xlu0 %277
        %279 = vset.pattern.permute.xlu0 0
        %280 = vperm.xlu0 %279, %v263
        %v281 = vpop.permute.xlu0 %280
        %282 = vset.pattern.permute.xlu0 0
        %283 = vperm.xlu0 %282, %v264
        %v284 = vpop.permute.xlu0 %283
        %285 = vset.pattern.permute.xlu0 0
        %286 = vperm.xlu0 %285, %v265
        %v287 = vpop.permute.xlu0 %286
        %288 = vset.pattern.permute.xlu0 0
        %289 = vperm.xlu0 %288, %v266
        %v290 = vpop.permute.xlu0 %289
        %vm291 = vcmp.eq.s32.totalorder %v154, %v269
        %vm292 = vcmp.eq.s32.totalorder %v154, %v272
        %vm293 = vcmp.eq.s32.totalorder %v154, %v275
        %vm294 = vcmp.eq.s32.totalorder %v154, %v278
        %vm295 = vcmp.eq.s32.totalorder %v154, %v281
        %vm296 = vcmp.eq.s32.totalorder %v154, %v284
        %vm297 = vcmp.eq.s32.totalorder %v154, %v287
        %vm298 = vcmp.eq.s32.totalorder %v154, %v290
        %vm299 = vmor %vm243, %vm291
        %vm300 = vmor %vm244, %vm292
        %vm301 = vmor %vm245, %vm293
        %vm302 = vmor %vm246, %vm294
        %vm303 = vmor %vm247, %vm295
        %vm304 = vmor %vm248, %vm296
        %vm305 = vmor %vm249, %vm297
        %vm306 = vmor %vm250, %vm298
        %v307 = vadd.s32 %v155, 16
        %v308 = vadd.s32 %v156, 16
        %v309 = vadd.s32 %v157, 16
        %v310 = vadd.s32 %v158, 16
        %v311 = vadd.s32 %v159, 16
        %v312 = vadd.s32 %v160, 16
        %v313 = vadd.s32 %v161, 16
        %v314 = vadd.s32 %v162, 16
        %315 = vset.pattern.permute.xlu0 1
        %316 = vperm.xlu0 %315, %v307
        %v317 = vpop.permute.xlu0 %316
        %318 = vset.pattern.permute.xlu0 1
        %319 = vperm.xlu0 %318, %v308
        %v320 = vpop.permute.xlu0 %319
        %321 = vset.pattern.permute.xlu0 1
        %322 = vperm.xlu0 %321, %v309
        %v323 = vpop.permute.xlu0 %322
        %324 = vset.pattern.permute.xlu0 1
        %325 = vperm.xlu0 %324, %v310
        %v326 = vpop.permute.xlu0 %325
        %327 = vset.pattern.permute.xlu0 1
        %328 = vperm.xlu0 %327, %v311
        %v329 = vpop.permute.xlu0 %328
        %330 = vset.pattern.permute.xlu0 1
        %331 = vperm.xlu0 %330, %v312
        %v332 = vpop.permute.xlu0 %331
        %333 = vset.pattern.permute.xlu0 1
        %334 = vperm.xlu0 %333, %v313
        %v335 = vpop.permute.xlu0 %334
        %336 = vset.pattern.permute.xlu0 1
        %337 = vperm.xlu0 %336, %v314
        %v338 = vpop.permute.xlu0 %337
        %vm339 = vcmp.eq.s32.totalorder %v154, %v317
        %vm340 = vcmp.eq.s32.totalorder %v154, %v320
        %vm341 = vcmp.eq.s32.totalorder %v154, %v323
        %vm342 = vcmp.eq.s32.totalorder %v154, %v326
        %vm343 = vcmp.eq.s32.totalorder %v154, %v329
        %vm344 = vcmp.eq.s32.totalorder %v154, %v332
        %vm345 = vcmp.eq.s32.totalorder %v154, %v335
        %vm346 = vcmp.eq.s32.totalorder %v154, %v338
        %vm347 = vmor %vm299, %vm339
        %vm348 = vmor %vm300, %vm340
        %vm349 = vmor %vm301, %vm341
        %vm350 = vmor %vm302, %vm342
        %vm351 = vmor %vm303, %vm343
        %vm352 = vmor %vm304, %vm344
        %vm353 = vmor %vm305, %vm345
        %vm354 = vmor %vm306, %vm346
        %v355 = vadd.s32 %v203, 16
        %v356 = vadd.s32 %v204, 16
        %v357 = vadd.s32 %v205, 16
        %v358 = vadd.s32 %v206, 16
        %v359 = vadd.s32 %v207, 16
        %v360 = vadd.s32 %v208, 16
        %v361 = vadd.s32 %v209, 16
        %v362 = vadd.s32 %v210, 16
        %363 = vset.pattern.permute.xlu0 1
        %364 = vperm.xlu0 %363, %v355
        %v365 = vpop.permute.xlu0 %364
        %366 = vset.pattern.permute.xlu0 1
        %367 = vperm.xlu0 %366, %v356
        %v368 = vpop.permute.xlu0 %367
        %369 = vset.pattern.permute.xlu0 1
        %370 = vperm.xlu0 %369, %v357
        %v371 = vpop.permute.xlu0 %370
        %372 = vset.pattern.permute.xlu0 1
        %373 = vperm.xlu0 %372, %v358
        %v374 = vpop.permute.xlu0 %373
        %375 = vset.pattern.permute.xlu0 1
        %376 = vperm.xlu0 %375, %v359
        %v377 = vpop.permute.xlu0 %376
        %378 = vset.pattern.permute.xlu0 1
        %379 = vperm.xlu0 %378, %v360
        %v380 = vpop.permute.xlu0 %379
        %381 = vset.pattern.permute.xlu0 1
        %382 = vperm.xlu0 %381, %v361
        %v383 = vpop.permute.xlu0 %382
        %384 = vset.pattern.permute.xlu0 1
        %385 = vperm.xlu0 %384, %v362
        %v386 = vpop.permute.xlu0 %385
        %vm387 = vcmp.eq.s32.totalorder %v154, %v365
        %vm388 = vcmp.eq.s32.totalorder %v154, %v368
        %vm389 = vcmp.eq.s32.totalorder %v154, %v371
        %vm390 = vcmp.eq.s32.totalorder %v154, %v374
        %vm391 = vcmp.eq.s32.totalorder %v154, %v377
        %vm392 = vcmp.eq.s32.totalorder %v154, %v380
        %vm393 = vcmp.eq.s32.totalorder %v154, %v383
        %vm394 = vcmp.eq.s32.totalorder %v154, %v386
        %vm395 = vmor %vm347, %vm387
        %vm396 = vmor %vm348, %vm388
        %vm397 = vmor %vm349, %vm389
        %vm398 = vmor %vm350, %vm390
        %vm399 = vmor %vm351, %vm391
        %vm400 = vmor %vm352, %vm392
        %vm401 = vmor %vm353, %vm393
        %vm402 = vmor %vm354, %vm394
        %v403 = vadd.s32 %v259, 16
        %v404 = vadd.s32 %v260, 16
        %v405 = vadd.s32 %v261, 16
        %v406 = vadd.s32 %v262, 16
        %v407 = vadd.s32 %v263, 16
        %v408 = vadd.s32 %v264, 16
        %v409 = vadd.s32 %v265, 16
        %v410 = vadd.s32 %v266, 16
        %411 = vset.pattern.permute.xlu0 1
        %412 = vperm.xlu0 %411, %v403
        %v413 = vpop.permute.xlu0 %412
        %414 = vset.pattern.permute.xlu0 1
        %415 = vperm.xlu0 %414, %v404
        %v416 = vpop.permute.xlu0 %415
        %417 = vset.pattern.permute.xlu0 1
        %418 = vperm.xlu0 %417, %v405
        %v419 = vpop.permute.xlu0 %418
        %420 = vset.pattern.permute.xlu0 1
        %421 = vperm.xlu0 %420, %v406
        %v422 = vpop.permute.xlu0 %421
        %423 = vset.pattern.permute.xlu0 1
        %424 = vperm.xlu0 %423, %v407
        %v425 = vpop.permute.xlu0 %424
        %426 = vset.pattern.permute.xlu0 1
        %427 = vperm.xlu0 %426, %v408
        %v428 = vpop.permute.xlu0 %427
        %429 = vset.pattern.permute.xlu0 1
        %430 = vperm.xlu0 %429, %v409
        %v431 = vpop.permute.xlu0 %430
        %432 = vset.pattern.permute.xlu0 1
        %433 = vperm.xlu0 %432, %v410
        %v434 = vpop.permute.xlu0 %433
        %vm435 = vcmp.eq.s32.totalorder %v154, %v413
        %vm436 = vcmp.eq.s32.totalorder %v154, %v416
        %vm437 = vcmp.eq.s32.totalorder %v154, %v419
        %vm438 = vcmp.eq.s32.totalorder %v154, %v422
        %vm439 = vcmp.eq.s32.totalorder %v154, %v425
        %vm440 = vcmp.eq.s32.totalorder %v154, %v428
        %vm441 = vcmp.eq.s32.totalorder %v154, %v431
        %vm442 = vcmp.eq.s32.totalorder %v154, %v434
        %vm443 = vmor %vm395, %vm435
        %vm444 = vmor %vm396, %vm436
        %vm445 = vmor %vm397, %vm437
        %vm446 = vmor %vm398, %vm438
        %vm447 = vmor %vm399, %vm439
        %vm448 = vmor %vm400, %vm440
        %vm449 = vmor %vm401, %vm441
        %vm450 = vmor %vm402, %vm442
        %v451 = vadd.s32 %v155, 32
        %v452 = vadd.s32 %v156, 32
        %v453 = vadd.s32 %v157, 32
        %v454 = vadd.s32 %v158, 32
        %v455 = vadd.s32 %v159, 32
        %v456 = vadd.s32 %v160, 32
        %v457 = vadd.s32 %v161, 32
        %v458 = vadd.s32 %v162, 32
        %459 = vset.pattern.permute.xlu0 2
        %460 = vperm.xlu0 %459, %v451
        %v461 = vpop.permute.xlu0 %460
        %462 = vset.pattern.permute.xlu0 2
        %463 = vperm.xlu0 %462, %v452
        %v464 = vpop.permute.xlu0 %463
        %465 = vset.pattern.permute.xlu0 2
        %466 = vperm.xlu0 %465, %v453
        %v467 = vpop.permute.xlu0 %466
        %468 = vset.pattern.permute.xlu0 2
        %469 = vperm.xlu0 %468, %v454
        %v470 = vpop.permute.xlu0 %469
        %471 = vset.pattern.permute.xlu0 2
        %472 = vperm.xlu0 %471, %v455
        %v473 = vpop.permute.xlu0 %472
        %474 = vset.pattern.permute.xlu0 2
        %475 = vperm.xlu0 %474, %v456
        %v476 = vpop.permute.xlu0 %475
        %477 = vset.pattern.permute.xlu0 2
        %478 = vperm.xlu0 %477, %v457
        %v479 = vpop.permute.xlu0 %478
        %480 = vset.pattern.permute.xlu0 2
        %481 = vperm.xlu0 %480, %v458
        %v482 = vpop.permute.xlu0 %481
        %vm483 = vcmp.eq.s32.totalorder %v154, %v461
        %vm484 = vcmp.eq.s32.totalorder %v154, %v464
        %vm485 = vcmp.eq.s32.totalorder %v154, %v467
        %vm486 = vcmp.eq.s32.totalorder %v154, %v470
        %vm487 = vcmp.eq.s32.totalorder %v154, %v473
        %vm488 = vcmp.eq.s32.totalorder %v154, %v476
        %vm489 = vcmp.eq.s32.totalorder %v154, %v479
        %vm490 = vcmp.eq.s32.totalorder %v154, %v482
        %vm491 = vmor %vm443, %vm483
        %vm492 = vmor %vm444, %vm484
        %vm493 = vmor %vm445, %vm485
        %vm494 = vmor %vm446, %vm486
        %vm495 = vmor %vm447, %vm487
        %vm496 = vmor %vm448, %vm488
        %vm497 = vmor %vm449, %vm489
        %vm498 = vmor %vm450, %vm490
        %v499 = vadd.s32 %v203, 32
        %v500 = vadd.s32 %v204, 32
        %v501 = vadd.s32 %v205, 32
        %v502 = vadd.s32 %v206, 32
        %v503 = vadd.s32 %v207, 32
        %v504 = vadd.s32 %v208, 32
        %v505 = vadd.s32 %v209, 32
        %v506 = vadd.s32 %v210, 32
        %507 = vset.pattern.permute.xlu0 2
        %508 = vperm.xlu0 %507, %v499
        %v509 = vpop.permute.xlu0 %508
        %510 = vset.pattern.permute.xlu0 2
        %511 = vperm.xlu0 %510, %v500
        %v512 = vpop.permute.xlu0 %511
        %513 = vset.pattern.permute.xlu0 2
        %514 = vperm.xlu0 %513, %v501
        %v515 = vpop.permute.xlu0 %514
        %516 = vset.pattern.permute.xlu0 2
        %517 = vperm.xlu0 %516, %v502
        %v518 = vpop.permute.xlu0 %517
        %519 = vset.pattern.permute.xlu0 2
        %520 = vperm.xlu0 %519, %v503
        %v521 = vpop.permute.xlu0 %520
        %522 = vset.pattern.permute.xlu0 2
        %523 = vperm.xlu0 %522, %v504
        %v524 = vpop.permute.xlu0 %523
        %525 = vset.pattern.permute.xlu0 2
        %526 = vperm.xlu0 %525, %v505
        %v527 = vpop.permute.xlu0 %526
        %528 = vset.pattern.permute.xlu0 2
        %529 = vperm.xlu0 %528, %v506
        %v530 = vpop.permute.xlu0 %529
        %vm531 = vcmp.eq.s32.totalorder %v154, %v509
        %vm532 = vcmp.eq.s32.totalorder %v154, %v512
        %vm533 = vcmp.eq.s32.totalorder %v154, %v515
        %vm534 = vcmp.eq.s32.totalorder %v154, %v518
        %vm535 = vcmp.eq.s32.totalorder %v154, %v521
        %vm536 = vcmp.eq.s32.totalorder %v154, %v524
        %vm537 = vcmp.eq.s32.totalorder %v154, %v527
        %vm538 = vcmp.eq.s32.totalorder %v154, %v530
        %vm539 = vmor %vm491, %vm531
        %vm540 = vmor %vm492, %vm532
        %vm541 = vmor %vm493, %vm533
        %vm542 = vmor %vm494, %vm534
        %vm543 = vmor %vm495, %vm535
        %vm544 = vmor %vm496, %vm536
        %vm545 = vmor %vm497, %vm537
        %vm546 = vmor %vm498, %vm538
        %v547 = vadd.s32 %v259, 32
        %v548 = vadd.s32 %v260, 32
        %v549 = vadd.s32 %v261, 32
        %v550 = vadd.s32 %v262, 32
        %v551 = vadd.s32 %v263, 32
        %v552 = vadd.s32 %v264, 32
        %v553 = vadd.s32 %v265, 32
        %v554 = vadd.s32 %v266, 32
        %555 = vset.pattern.permute.xlu0 2
        %556 = vperm.xlu0 %555, %v547
        %v557 = vpop.permute.xlu0 %556
        %558 = vset.pattern.permute.xlu0 2
        %559 = vperm.xlu0 %558, %v548
        %v560 = vpop.permute.xlu0 %559
        %561 = vset.pattern.permute.xlu0 2
        %562 = vperm.xlu0 %561, %v549
        %v563 = vpop.permute.xlu0 %562
        %564 = vset.pattern.permute.xlu0 2
        %565 = vperm.xlu0 %564, %v550
        %v566 = vpop.permute.xlu0 %565
        %567 = vset.pattern.permute.xlu0 2
        %568 = vperm.xlu0 %567, %v551
        %v569 = vpop.permute.xlu0 %568
        %570 = vset.pattern.permute.xlu0 2
        %571 = vperm.xlu0 %570, %v552
        %v572 = vpop.permute.xlu0 %571
        %573 = vset.pattern.permute.xlu0 2
        %574 = vperm.xlu0 %573, %v553
        %v575 = vpop.permute.xlu0 %574
        %576 = vset.pattern.permute.xlu0 2
        %577 = vperm.xlu0 %576, %v554
        %v578 = vpop.permute.xlu0 %577
        %vm579 = vcmp.eq.s32.totalorder %v154, %v557
        %vm580 = vcmp.eq.s32.totalorder %v154, %v560
        %vm581 = vcmp.eq.s32.totalorder %v154, %v563
        %vm582 = vcmp.eq.s32.totalorder %v154, %v566
        %vm583 = vcmp.eq.s32.totalorder %v154, %v569
        %vm584 = vcmp.eq.s32.totalorder %v154, %v572
        %vm585 = vcmp.eq.s32.totalorder %v154, %v575
        %vm586 = vcmp.eq.s32.totalorder %v154, %v578
        %vm587 = vmor %vm539, %vm579
        %vm588 = vmor %vm540, %vm580
        %vm589 = vmor %vm541, %vm581
        %vm590 = vmor %vm542, %vm582
        %vm591 = vmor %vm543, %vm583
        %vm592 = vmor %vm544, %vm584
        %vm593 = vmor %vm545, %vm585
        %vm594 = vmor %vm546, %vm586
        %v595 = vadd.s32 %v155, 48
        %v596 = vadd.s32 %v156, 48
        %v597 = vadd.s32 %v157, 48
        %v598 = vadd.s32 %v158, 48
        %v599 = vadd.s32 %v159, 48
        %v600 = vadd.s32 %v160, 48
        %v601 = vadd.s32 %v161, 48
        %v602 = vadd.s32 %v162, 48
        %603 = vset.pattern.permute.xlu0 3
        %604 = vperm.xlu0 %603, %v595
        %v605 = vpop.permute.xlu0 %604
        %606 = vset.pattern.permute.xlu0 3
        %607 = vperm.xlu0 %606, %v596
        %v608 = vpop.permute.xlu0 %607
        %609 = vset.pattern.permute.xlu0 3
        %610 = vperm.xlu0 %609, %v597
        %v611 = vpop.permute.xlu0 %610
        %612 = vset.pattern.permute.xlu0 3
        %613 = vperm.xlu0 %612, %v598
        %v614 = vpop.permute.xlu0 %613
        %615 = vset.pattern.permute.xlu0 3
        %616 = vperm.xlu0 %615, %v599
        %v617 = vpop.permute.xlu0 %616
        %618 = vset.pattern.permute.xlu0 3
        %619 = vperm.xlu0 %618, %v600
        %v620 = vpop.permute.xlu0 %619
        %621 = vset.pattern.permute.xlu0 3
        %622 = vperm.xlu0 %621, %v601
        %v623 = vpop.permute.xlu0 %622
        %624 = vset.pattern.permute.xlu0 3
        %625 = vperm.xlu0 %624, %v602
        %v626 = vpop.permute.xlu0 %625
        %vm627 = vcmp.eq.s32.totalorder %v154, %v605
        %vm628 = vcmp.eq.s32.totalorder %v154, %v608
        %vm629 = vcmp.eq.s32.totalorder %v154, %v611
        %vm630 = vcmp.eq.s32.totalorder %v154, %v614
        %vm631 = vcmp.eq.s32.totalorder %v154, %v617
        %vm632 = vcmp.eq.s32.totalorder %v154, %v620
        %vm633 = vcmp.eq.s32.totalorder %v154, %v623
        %vm634 = vcmp.eq.s32.totalorder %v154, %v626
        %vm635 = vmor %vm587, %vm627
        %vm636 = vmor %vm588, %vm628
        %vm637 = vmor %vm589, %vm629
        %vm638 = vmor %vm590, %vm630
        %vm639 = vmor %vm591, %vm631
        %vm640 = vmor %vm592, %vm632
        %vm641 = vmor %vm593, %vm633
        %vm642 = vmor %vm594, %vm634
        %v643 = vadd.s32 %v203, 48
        %v644 = vadd.s32 %v204, 48
        %v645 = vadd.s32 %v205, 48
        %v646 = vadd.s32 %v206, 48
        %v647 = vadd.s32 %v207, 48
        %v648 = vadd.s32 %v208, 48
        %v649 = vadd.s32 %v209, 48
        %v650 = vadd.s32 %v210, 48
        %651 = vset.pattern.permute.xlu0 3
        %652 = vperm.xlu0 %651, %v643
        %v653 = vpop.permute.xlu0 %652
        %654 = vset.pattern.permute.xlu0 3
        %655 = vperm.xlu0 %654, %v644
        %v656 = vpop.permute.xlu0 %655
        %657 = vset.pattern.permute.xlu0 3
        %658 = vperm.xlu0 %657, %v645
        %v659 = vpop.permute.xlu0 %658
        %660 = vset.pattern.permute.xlu0 3
        %661 = vperm.xlu0 %660, %v646
        %v662 = vpop.permute.xlu0 %661
        %663 = vset.pattern.permute.xlu0 3
        %664 = vperm.xlu0 %663, %v647
        %v665 = vpop.permute.xlu0 %664
        %666 = vset.pattern.permute.xlu0 3
        %667 = vperm.xlu0 %666, %v648
        %v668 = vpop.permute.xlu0 %667
        %669 = vset.pattern.permute.xlu0 3
        %670 = vperm.xlu0 %669, %v649
        %v671 = vpop.permute.xlu0 %670
        %672 = vset.pattern.permute.xlu0 3
        %673 = vperm.xlu0 %672, %v650
        %v674 = vpop.permute.xlu0 %673
        %vm675 = vcmp.eq.s32.totalorder %v154, %v653
        %vm676 = vcmp.eq.s32.totalorder %v154, %v656
        %vm677 = vcmp.eq.s32.totalorder %v154, %v659
        %vm678 = vcmp.eq.s32.totalorder %v154, %v662
        %vm679 = vcmp.eq.s32.totalorder %v154, %v665
        %vm680 = vcmp.eq.s32.totalorder %v154, %v668
        %vm681 = vcmp.eq.s32.totalorder %v154, %v671
        %vm682 = vcmp.eq.s32.totalorder %v154, %v674
        %vm683 = vmor %vm635, %vm675
        %vm684 = vmor %vm636, %vm676
        %vm685 = vmor %vm637, %vm677
        %vm686 = vmor %vm638, %vm678
        %vm687 = vmor %vm639, %vm679
        %vm688 = vmor %vm640, %vm680
        %vm689 = vmor %vm641, %vm681
        %vm690 = vmor %vm642, %vm682
        %v691 = vadd.s32 %v259, 48
        %v692 = vadd.s32 %v260, 48
        %v693 = vadd.s32 %v261, 48
        %v694 = vadd.s32 %v262, 48
        %v695 = vadd.s32 %v263, 48
        %v696 = vadd.s32 %v264, 48
        %v697 = vadd.s32 %v265, 48
        %v698 = vadd.s32 %v266, 48
        %699 = vset.pattern.permute.xlu0 3
        %700 = vperm.xlu0 %699, %v691
        %v701 = vpop.permute.xlu0 %700
        %702 = vset.pattern.permute.xlu0 3
        %703 = vperm.xlu0 %702, %v692
        %v704 = vpop.permute.xlu0 %703
        %705 = vset.pattern.permute.xlu0 3
        %706 = vperm.xlu0 %705, %v693
        %v707 = vpop.permute.xlu0 %706
        %708 = vset.pattern.permute.xlu0 3
        %709 = vperm.xlu0 %708, %v694
        %v710 = vpop.permute.xlu0 %709
        %711 = vset.pattern.permute.xlu0 3
        %712 = vperm.xlu0 %711, %v695
        %v713 = vpop.permute.xlu0 %712
        %714 = vset.pattern.permute.xlu0 3
        %715 = vperm.xlu0 %714, %v696
        %v716 = vpop.permute.xlu0 %715
        %717 = vset.pattern.permute.xlu0 3
        %718 = vperm.xlu0 %717, %v697
        %v719 = vpop.permute.xlu0 %718
        %720 = vset.pattern.permute.xlu0 3
        %721 = vperm.xlu0 %720, %v698
        %v722 = vpop.permute.xlu0 %721
        %vm723 = vcmp.eq.s32.totalorder %v154, %v701
        %vm724 = vcmp.eq.s32.totalorder %v154, %v704
        %vm725 = vcmp.eq.s32.totalorder %v154, %v707
        %vm726 = vcmp.eq.s32.totalorder %v154, %v710
        %vm727 = vcmp.eq.s32.totalorder %v154, %v713
        %vm728 = vcmp.eq.s32.totalorder %v154, %v716
        %vm729 = vcmp.eq.s32.totalorder %v154, %v719
        %vm730 = vcmp.eq.s32.totalorder %v154, %v722
        %vm731 = vmor %vm683, %vm723
        %vm732 = vmor %vm684, %vm724
        %vm733 = vmor %vm685, %vm725
        %vm734 = vmor %vm686, %vm726
        %vm735 = vmor %vm687, %vm727
        %vm736 = vmor %vm688, %vm728
        %vm737 = vmor %vm689, %vm729
        %vm738 = vmor %vm690, %vm730
        %v739 = vsel %vm731, 1, 0
        %v740 = vsel %vm732, 1, 0
        %v741 = vsel %vm733, 1, 0
        %v742 = vsel %vm734, 1, 0
        %v743 = vsel %vm735, 1, 0
        %v744 = vsel %vm736, 1, 0
        %v745 = vsel %vm737, 1, 0
        %v746 = vsel %vm738, 1, 0
        %v747 = vcvt.s32.f32 %v739
        %v748 = vcvt.s32.f32 %v740
        %v749 = vcvt.s32.f32 %v741
        %v750 = vcvt.s32.f32 %v742
        %v751 = vcvt.s32.f32 %v743
        %v752 = vcvt.s32.f32 %v744
        %v753 = vcvt.s32.f32 %v745
        %v754 = vcvt.s32.f32 %v746
        %v755 = vld [vmem:[%s1] sm:$0xff]
        %v756 = vld [vmem:[%s1 + $0x8] sm:$0xff]
        %v757 = vld [vmem:[%s1 + $0x10] sm:$0xff]
        %v758 = vld [vmem:[%s1 + $0x18] sm:$0xff]
        %v759 = vld [vmem:[%s1 + $0x20] sm:$0xff]
        %v760 = vld [vmem:[%s1 + $0x28] sm:$0xff]
        %v761 = vld [vmem:[%s1 + $0x30] sm:$0xff]
        %v762 = vld [vmem:[%s1 + $0x38] sm:$0xff]
        %vm763 = vcmask 523264
        %v765 = vsel %vm763, %v747, 0
        %v768 = vsel %vm763, %v748, 0
        %v771 = vsel %vm763, %v749, 0
        %v774 = vsel %vm763, %v750, 0
        %v777 = vsel %vm763, %v751, 0
        %v780 = vsel %vm763, %v752, 0
        %v783 = vsel %vm763, %v753, 0
        %v786 = vsel %vm763, %v754, 0
        %788 = vmatprep.subr.mxu0 0.0
        %789 = vmatpush1.msra.mxu0 %v755
        %790 = vmatprep.subr.mxu0 0.0
        %791 = vmatpush1.msra.mxu0 %v756
        %792 = vmatprep.subr.mxu0 0.0
        %793 = vmatpush1.msra.mxu0 %v757
        %794 = vmatprep.subr.mxu0 0.0
        %795 = vmatpush1.msra.mxu0 %v758
        %796 = vmatprep.subr.mxu0 0.0
        %797 = vmatpush1.msra.mxu0 %v759
        %798 = vmatprep.subr.mxu0 0.0
        %799 = vmatpush1.msra.mxu0 %v760
        %800 = vmatprep.subr.mxu0 0.0
        %801 = vmatpush1.msra.mxu0 %v761
        %802 = vmatprep.subr.mxu0 0.0
        %803 = vmatpush1.msra.mxu0 %v762
        %804 = vmatprep.subr.mxu0 0.0
        %805 = vmatpush1.msra.mxu0 0.0
        %806 = vmatprep.subr.mxu0 0.0
        %807 = vmatpush1.msra.mxu0 0.0
        %808 = vmatprep.subr.mxu0 0.0
        %809 = vmatpush1.msra.mxu0 0.0
        %810 = vmatprep.subr.mxu0 0.0
        %811 = vmatpush1.msra.mxu0 0.0
        %812 = vmatprep.subr.mxu0 0.0
        %813 = vmatpush1.msra.mxu0 0.0
        %814 = vmatprep.subr.mxu0 0.0
        %815 = vmatpush1.msra.mxu0 0.0
        %816 = vmatprep.subr.mxu0 0.0
        %817 = vmatpush1.msra.mxu0 0.0
        %818 = vmatprep.subr.mxu0 0.0
        %819 = vmatpush1.msra.mxu0 0.0
        %820 = vmatprep.subr.mxu0 0.0
        %821 = vmatpush1.msra.mxu0 0.0
        %822 = vmatprep.subr.mxu0 0.0
        %823 = vmatpush1.msra.mxu0 0.0
        %824 = vmatprep.subr.mxu0 0.0
        %825 = vmatpush1.msra.mxu0 0.0
        %826 = vmatprep.subr.mxu0 0.0
        %827 = vmatpush1.msra.mxu0 0.0
        %828 = vmatprep.subr.mxu0 0.0
        %829 = vmatpush1.msra.mxu0 0.0
        %830 = vmatprep.subr.mxu0 0.0
        %831 = vmatpush1.msra.mxu0 0.0
        %832 = vmatprep.subr.mxu0 0.0
        %833 = vmatpush1.msra.mxu0 0.0
        %834 = vmatprep.subr.mxu0 0.0
        %835 = vmatpush1.msra.mxu0 0.0
        %836 = vmatprep.subr.mxu0 0.0
        %837 = vmatpush1.msra.mxu0 0.0
        %838 = vmatprep.subr.mxu0 0.0
        %839 = vmatpush1.msra.mxu0 0.0
        %840 = vmatprep.subr.mxu0 0.0
        %841 = vmatpush1.msra.mxu0 0.0
        %842 = vmatprep.subr.mxu0 0.0
        %843 = vmatpush1.msra.mxu0 0.0
        %844 = vmatprep.subr.mxu0 0.0
        %845 = vmatpush1.msra.mxu0 0.0
        %846 = vmatprep.subr.mxu0 0.0
        %847 = vmatpush1.msra.mxu0 0.0
        %848 = vmatprep.subr.mxu0 0.0
        %849 = vmatpush1.msra.mxu0 0.0
        %850 = vmatprep.subr.mxu0 0.0
        %851 = vmatpush1.msra.mxu0 0.0
        %852 = vmatprep.mubr.f32.mxu0 0.0
        %853 = vmatmul.mubr.f32.gmra.mrb[0].mxu0 %v765
        %v854 = vpop.f32.mrb[0].mxu0
        %v855 = vadd.f32 0.0, %v854
        %v856 = vpop.f32.mrb[0].mxu0
        %857 = vmatprep.mubr.f32.mxu0 0.0
        %858 = vmatmul.mubr.f32.gmra.mrb[0].mxu0 %v768
        %v859 = vpop.f32.mrb[0].mxu0
        %v860 = vadd.f32 0.0, %v859
        %v861 = vpop.f32.mrb[0].mxu0
        %862 = vmatprep.mubr.f32.mxu0 0.0
        %863 = vmatmul.mubr.f32.gmra.mrb[0].mxu0 %v771
        %v864 = vpop.f32.mrb[0].mxu0
        %v865 = vadd.f32 0.0, %v864
        %v866 = vpop.f32.mrb[0].mxu0
        %867 = vmatprep.mubr.f32.mxu0 0.0
        %868 = vmatmul.mubr.f32.gmra.mrb[0].mxu0 %v774
        %v869 = vpop.f32.mrb[0].mxu0
        %v870 = vadd.f32 0.0, %v869
        %v871 = vpop.f32.mrb[0].mxu0
        %872 = vmatprep.mubr.f32.mxu0 0.0
        %873 = vmatmul.mubr.f32.gmra.mrb[0].mxu0 %v777
        %v874 = vpop.f32.mrb[0].mxu0
        %v875 = vadd.f32 0.0, %v874
        %v876 = vpop.f32.mrb[0].mxu0
        %877 = vmatprep.mubr.f32.mxu0 0.0
        %878 = vmatmul.mubr.f32.gmra.mrb[0].mxu0 %v780
        %v879 = vpop.f32.mrb[0].mxu0
        %v880 = vadd.f32 0.0, %v879
        %v881 = vpop.f32.mrb[0].mxu0
        %882 = vmatprep.mubr.f32.mxu0 0.0
        %883 = vmatmul.mubr.f32.gmra.mrb[0].mxu0 %v783
        %v884 = vpop.f32.mrb[0].mxu0
        %v885 = vadd.f32 0.0, %v884
        %v886 = vpop.f32.mrb[0].mxu0
        %887 = vmatprep.mubr.f32.mxu0 0.0
        %888 = vmatmul.mubr.f32.gmra.mrb[0].mxu0 %v786
        %v889 = vpop.f32.mrb[0].mxu0
        %v890 = vadd.f32 0.0, %v889
        %v891 = vpop.f32.mrb[0].mxu0
        %892 = vdwg.mxu0
        %893 = vst [vmem:[%s137] sm:$0xff] %v855
        %894 = vst [vmem:[%s137 + $0x8] sm:$0xff] %v860
        %895 = vst [vmem:[%s137 + $0x10] sm:$0xff] %v865
        %896 = vst [vmem:[%s137 + $0x18] sm:$0xff] %v870
        %897 = vst [vmem:[%s137 + $0x20] sm:$0xff] %v875
        %898 = vst [vmem:[%s137 + $0x28] sm:$0xff] %v880
        %899 = vst [vmem:[%s137 + $0x30] sm:$0xff] %v885
        %900 = vst [vmem:[%s137 + $0x38] sm:$0xff] %v890
        %s901 = sand.u32 %s71, 1
        %s902 = scalar_lea.sflag [#allocation3], %s901
        %s903 = sand.u32 %s71, 1
        %s904 = smul.addr %s903, 64
        %s905 = scalar_lea.vmem [#allocation2], %s904
        // Predicated region
        $region29: #{tpu_custom_call.1} parent=27 // pred_check
          %p906 = pneg %p81
        $region30: #{tpu_custom_call.1} parent=27 // pred_check_branch
          %908 = sbr.rel (%p906) target = $region32
        $region31: #{tpu_custom_call.1} parent=27 // pred_region
          %s909 = smul.u32 8, %s16
          %s911 = ssub.s32 1024, 1024
          %912 = vsyncadd %s902, %s911
          %s913 = smul.addr %s909, 128
          %s914 = scalar_lea.hbm %s2, %s913
          %s915 = sshll.u32 %s905, 4
          %s916 = int_to_ptr.vmem [resolvable:$true] %s915
          %921 = dma.vmem_to_hbm [thread:$0]  %s916, 1024, %s914, %s902, 128, 128, 8
        $region32: #{tpu_custom_call.1} parent=27 // pred_fallthru
          _
      $region28: #{tpu_custom_call.1} parent=5 // pred_fallthru
        _
      %p922 = scmp.le.s32.totalorder 2, %s11
      // Predicated region
      $region33: #{tpu_custom_call.1} parent=5 // pred_check
        %p923 = pneg %p922
      $region34: #{tpu_custom_call.1} parent=5 // pred_check_branch
        %925 = sbr.rel (%p923) target = $region36
      $region35: #{tpu_custom_call.1} parent=5 // pred_region
        %s926 = ssub.s32 %s11, 2
        // Predicated region
        $region37: #{tpu_custom_call.1} parent=35 // pred_check
          %p927 = pneg %p87
        $region38: #{tpu_custom_call.1} parent=35 // pred_check_branch
          %929 = sbr.rel (%p927) target = $region40
        $region39: #{tpu_custom_call.1} parent=35 // pred_region
          %s930 = sand.u32 %s72, 1
          %s931 = scalar_lea.sflag [#allocation3], %s930
          %s932 = sand.u32 %s72, 1
          %s933 = smul.addr %s932, 64
          %s934 = scalar_lea.vmem [#allocation2], %s933
          %935 = dma.done %s931, 1024
        $region40: #{tpu_custom_call.1} parent=35 // pred_fallthru
          _
      $region36: #{tpu_custom_call.1} parent=5 // pred_fallthru
        _
    $region6: #{tpu_custom_call.1} parent=1 // loop_footer
      %s15 = sadd.s32 1, %s11
    $region7: #{tpu_custom_call.1} parent=1 // loop_footer_branch
      %10 = sbr.rel target = $region3
    $region8: #{tpu_custom_call.1} parent=1 // loop_exit
      _
    %936 = vsyncpa [#allocation3], 1
    %s937 = scalar_lea.sflag [#allocation3], 1
    %938 = vsyncpa %s937, 1

</llo_original>
